<compile_context>
chip_gen: v7x
topology: tpu7x:2x2x1
jax: 0.10.0
libtpu: 0.0.40
codegen_flags: <defaults>
</compile_context>

<pallas_src>
import math

import jax
import jax.numpy as jnp
from jax.experimental import pallas as pl
from jax.experimental.pallas import tpu as pltpu

# Range-reduction thresholds / constants (Cephes atanf).
_TAN_3PI_8 = 2.414213562373095      # tan(3*pi/8)
_TAN_PI_8 = 0.4142135623730950      # tan(pi/8) = sqrt(2) - 1
_PI_2 = 0.5 * math.pi
_PI_4 = 0.25 * math.pi
# atan(w) ~= w + w^3 * P(w^2) for |w| <= tan(pi/8)
_P3 = 8.05374449538e-2
_P2 = -1.38776856032e-1
_P1 = 1.99777106478e-1
_P0 = -3.33329491539e-1


def _atan_f32(z):
    """float32 arctan from basic Mosaic-lowerable ops (~2 ulp, Cephes-style)."""
    t = jnp.abs(z)
    big = t > _TAN_3PI_8
    mid = t > _TAN_PI_8
    # Single division covering all three reduction branches:
    #   big:  w = -1 / t           offset = pi/2
    #   mid:  w = (t - 1)/(t + 1)  offset = pi/4
    #   else: w = t                offset = 0
    num = jnp.where(big, -1.0, jnp.where(mid, t - 1.0, t))
    den = jnp.where(big, t, jnp.where(mid, t + 1.0, 1.0))
    w = num / den
    offset = jnp.where(big, _PI_2, jnp.where(mid, _PI_4, 0.0))
    w2 = w * w
    p = ((_P3 * w2 + _P2) * w2 + _P1) * w2 + _P0
    r = offset + (p * w2 * w + w)
    return jnp.where(z < 0.0, -r, r)


def _expanded_gating_kernel(params_ref, x_ref, o_ref):
    # params_ref : SMEM f32[2] = (alpha, beta)
    # x_ref/o_ref: VMEM tiles (block_rows, 128) in the input's native dtype
    alpha = params_ref[0]
    beta = params_ref[1]
    x = x_ref[...].astype(jnp.float32)        # internal math in f32 (v5e-safe)
    o_ref[...] = _atan_f32(alpha * x + beta).astype(o_ref.dtype)


def expanded_gating_activation(x: jax.Array, alpha, beta, *,
                               block_rows: int = 2048) -> jax.Array:
    """y = atan(alpha * x + beta), elementwise, via a Pallas TPU kernel."""
    orig_shape = x.shape
    orig_dtype = x.dtype
    lanes = 128

    n = x.size
    xf = x.reshape(-1)
    rem = n % lanes
    padded = rem != 0
    if padded:                                  # minimal pad, only if needed
        xf = jnp.pad(xf, (0, lanes - rem))
    rows = xf.shape[0] // lanes
    x2d = xf.reshape(rows, lanes)

    # Biggest available (block_rows, 128) tile; either a multiple of 8 rows
    # (2048) or the full row extent. Ragged last block handled by cdiv grid.
    br = min(block_rows, rows)
    grid = (pl.cdiv(rows, br),)

    params = jnp.stack([
        jnp.asarray(alpha, dtype=jnp.float32).reshape(()),
        jnp.asarray(beta, dtype=jnp.float32).reshape(()),
    ])

    out2d = pl.pallas_call(
        _expanded_gating_kernel,
        out_shape=jax.ShapeDtypeStruct((rows, lanes), orig_dtype),
        grid=grid,
        in_specs=[
            pl.BlockSpec(memory_space=pltpu.SMEM),        # (alpha, beta) scalars
            pl.BlockSpec((br, lanes), lambda i: (i, 0)),
        ],
        out_specs=pl.BlockSpec((br, lanes), lambda i: (i, 0)),
        compiler_params=pltpu.CompilerParams(
            dimension_semantics=("parallel",),            # megacore on v7x
        ),
    )(params, x2d)

    out = out2d.reshape(-1)
    if padded:
        out = out[:n]
    return out.reshape(orig_shape)


if __name__ == "__main__":
    key = jax.random.PRNGKey(0)
    # NCHW activations; scaled so all three atan range-reduction branches hit.
    x = jax.random.normal(key, (2, 4, 16, 16), dtype=jnp.float32) * 3.0

    # Parameter init matching nn.Parameter(torch.tensor(1.0)) / (0.0)
    alpha = jnp.float32(1.0)
    beta = jnp.float32(0.0)

    y = jax.block_until_ready(expanded_gating_activation(x, alpha, beta))
    y_ref = jnp.arctan(alpha * x + beta)
    assert y.shape == x.shape and y.dtype == x.dtype
    assert jnp.allclose(y, y_ref, atol=1e-5, rtol=1e-5)

    # Non-trivial alpha / beta.
    alpha2, beta2 = jnp.float32(1.7), jnp.float32(-0.3)
    y2 = jax.block_until_ready(expanded_gating_activation(x, alpha2, beta2))
    y2_ref = jnp.arctan(alpha2 * x + beta2)
    assert jnp.allclose(y2, y2_ref, atol=1e-5, rtol=1e-5)

    # Native bf16 streaming path (f32 math inside, bf16 in/out of HBM).
    xb = x.astype(jnp.bfloat16)
    yb = jax.block_until_ready(expanded_gating_activation(xb, alpha2, beta2))
    yb_ref = jnp.arctan(alpha2 * xb.astype(jnp.float32) + beta2).astype(jnp.bfloat16)
    assert yb.dtype == jnp.bfloat16
    assert jnp.allclose(yb.astype(jnp.float32), yb_ref.astype(jnp.float32),
                        atol=2e-2, rtol=2e-2)

    print("KERNEL_OK")
</pallas_src>

<mosaic_0001>
module attributes {stable_mosaic.version = 11 : i64} {
  func.func @_expanded_gating_kernel(%arg0: i32, %arg1: memref<2xf32, #tpu.memory_space<smem>>, %arg2: memref<16x128xf32, #tpu.memory_space<vmem>>, %arg3: memref<16x128xf32, #tpu.memory_space<vmem>>) attributes {dimension_semantics = [#tpu.dimension_semantics<parallel>], iteration_bounds = array<i64: 1>, scalar_prefetch = 0 : i64, scratch_operands = 0 : i64, tpu.core_type = #tpu.core_type<tc>, window_params = [{transform_indices = @transform_0, window_bounds = array<i64: 2>}, {transform_indices = @transform_1, window_bounds = array<i64: 16, 128>}, {transform_indices = @transform_2, window_bounds = array<i64: 16, 128>}]} {
    %c0 = arith.constant 0 : index
    %0 = memref.load %arg1[%c0] : memref<2xf32, #tpu.memory_space<smem>>
    %c1 = arith.constant 1 : index
    %1 = memref.load %arg1[%c1] : memref<2xf32, #tpu.memory_space<smem>>
    %c0_0 = arith.constant 0 : index
    %c0_1 = arith.constant 0 : index
    %2 = vector.load %arg2[%c0_0, %c0_1] : memref<16x128xf32, #tpu.memory_space<vmem>>, vector<16x128xf32>
    %3 = vector.broadcast %0 : f32 to vector<16x128xf32>
    %4 = arith.mulf %3, %2 : vector<16x128xf32>
    %5 = vector.broadcast %1 : f32 to vector<16x128xf32>
    %6 = arith.addf %4, %5 : vector<16x128xf32>
    %7 = math.absf %6 : vector<16x128xf32>
    %cst = arith.constant 2.41421366 : f32
    %8 = vector.broadcast %cst : f32 to vector<16x128xf32>
    %9 = arith.cmpf ogt, %7, %8 : vector<16x128xf32>
    %cst_2 = arith.constant 0.414213568 : f32
    %10 = vector.broadcast %cst_2 : f32 to vector<16x128xf32>
    %11 = arith.cmpf ogt, %7, %10 : vector<16x128xf32>
    %cst_3 = arith.constant 1.000000e+00 : f32
    %12 = vector.broadcast %cst_3 : f32 to vector<16x128xf32>
    %13 = arith.subf %7, %12 : vector<16x128xf32>
    %14 = arith.select %11, %13, %7 : vector<16x128xi1>, vector<16x128xf32>
    %cst_4 = arith.constant -1.000000e+00 : f32
    %15 = vector.broadcast %cst_4 : f32 to vector<16x128xf32>
    %16 = arith.select %9, %15, %14 : vector<16x128xi1>, vector<16x128xf32>
    %cst_5 = arith.constant 1.000000e+00 : f32
    %17 = vector.broadcast %cst_5 : f32 to vector<16x128xf32>
    %18 = arith.addf %7, %17 : vector<16x128xf32>
    %cst_6 = arith.constant 1.000000e+00 : f32
    %19 = vector.broadcast %cst_6 : f32 to vector<16x128xf32>
    %20 = arith.select %11, %18, %19 : vector<16x128xi1>, vector<16x128xf32>
    %21 = arith.select %9, %7, %20 : vector<16x128xi1>, vector<16x128xf32>
    %22 = arith.divf %16, %21 : vector<16x128xf32>
    %cst_7 = arith.constant 0.785398185 : f32
    %cst_8 = arith.constant 0.000000e+00 : f32
    %23 = vector.broadcast %cst_7 : f32 to vector<16x128xf32>
    %24 = vector.broadcast %cst_8 : f32 to vector<16x128xf32>
    %25 = arith.select %11, %23, %24 : vector<16x128xi1>, vector<16x128xf32>
    %cst_9 = arith.constant 1.57079637 : f32
    %26 = vector.broadcast %cst_9 : f32 to vector<16x128xf32>
    %27 = arith.select %9, %26, %25 : vector<16x128xi1>, vector<16x128xf32>
    %28 = arith.mulf %22, %22 : vector<16x128xf32>
    %cst_10 = arith.constant 0.0805374458 : f32
    %29 = vector.broadcast %cst_10 : f32 to vector<16x128xf32>
    %30 = arith.mulf %29, %28 : vector<16x128xf32>
    %cst_11 = arith.constant -0.138776854 : f32
    %31 = vector.broadcast %cst_11 : f32 to vector<16x128xf32>
    %32 = arith.addf %30, %31 : vector<16x128xf32>
    %33 = arith.mulf %32, %28 : vector<16x128xf32>
    %cst_12 = arith.constant 0.199777111 : f32
    %34 = vector.broadcast %cst_12 : f32 to vector<16x128xf32>
    %35 = arith.addf %33, %34 : vector<16x128xf32>
    %36 = arith.mulf %35, %28 : vector<16x128xf32>
    %cst_13 = arith.constant -0.333329499 : f32
    %37 = vector.broadcast %cst_13 : f32 to vector<16x128xf32>
    %38 = arith.addf %36, %37 : vector<16x128xf32>
    %39 = arith.mulf %38, %28 : vector<16x128xf32>
    %40 = arith.mulf %39, %22 : vector<16x128xf32>
    %41 = arith.addf %40, %22 : vector<16x128xf32>
    %42 = arith.addf %27, %41 : vector<16x128xf32>
    %cst_14 = arith.constant 0.000000e+00 : f32
    %43 = vector.broadcast %cst_14 : f32 to vector<16x128xf32>
    %44 = arith.cmpf olt, %6, %43 : vector<16x128xf32>
    %cst_15 = arith.constant 0.000000e+00 : f32
    %45 = vector.broadcast %cst_15 : f32 to vector<16x128xf32>
    %46 = arith.subf %45, %42 : vector<16x128xf32>
    %47 = arith.select %44, %46, %42 : vector<16x128xi1>, vector<16x128xf32>
    %c0_16 = arith.constant 0 : index
    %c0_17 = arith.constant 0 : index
    %48 = vector.load %arg3[%c0_16, %c0_17] : memref<16x128xf32, #tpu.memory_space<vmem>>, vector<16x128xf32>
    tpu.vector_store %arg3[%c0_16, %c0_17], %47 {strides = array<i32>} : memref<16x128xf32, #tpu.memory_space<vmem>>, vector<16x128xf32>,
    return
  }
  func.func @transform_0(%arg0: i32) -> i32 {
    %c0_i32 = arith.constant 0 : i32
    %c0_i32_0 = arith.constant 0 : i32
    return %c0_i32 : i32
  }
  func.func @transform_1(%arg0: i32) -> (i32, i32) {
    %c0_i32 = arith.constant 0 : i32
    %c0_i32_0 = arith.constant 0 : i32
    return %arg0, %c0_i32 : i32, i32
  }
  func.func @transform_2(%arg0: i32) -> (i32, i32) {
    %c0_i32 = arith.constant 0 : i32
    %c0_i32_0 = arith.constant 0 : i32
    return %arg0, %c0_i32 : i32, i32
  }
}

</mosaic_0001>

<llo_original>
// kernel: tpu_custom_call.1
$region0: #{tpu_custom_call.1}
  #allocation0 [shape = 'u32[]', space=smem, size = 0x4, offset = 0x4, fixed_abs, tag = 'smem constant byte address 0x4 - core index']
  #allocation1 [shape = 'u32[144,128]{1,0:T(1,128)}', space=vmem, size = 0x12000, scoped, tag = 'internal scratch']
  %s0 = inlined_call_operand.hbm [shape: f32[2], index: 0, kind: input, shape index: {}]
  %s1 = inlined_call_operand.hbm [shape: f32[16,128], index: 1, kind: input, shape index: {}]
  %s2 = inlined_call_operand.hbm [shape: f32[16,128], index: 2, kind: output, shape index: {}]
  %s3 = sld [smem:[#allocation0]]
  $region26: #{tpu_custom_call.1} parent=0
    _
  %s5 = ssub.s32 1, %s3
  %s6 = scalar_select 0, %s5, %s3
  $region1: #{tpu_custom_call.1} parent=0
    #allocation2 [shape = 'u8[512]{0}', space=smem, size = 0x200, scoped, tag = 'input window, operand 0, single buffered']
    #allocation3 [shape = 's32[1]{0}', space=sflag, size = 0x4, scoped, tag = 'scoped memory for tpu_custom_call.1']
    #allocation4 [shape = 's32[1]{0}', space=sflag, size = 0x4, scoped, tag = 'scoped memory for tpu_custom_call.1']
    #allocation5 [shape = 's32[1]{0}', space=sflag, size = 0x4, scoped, tag = 'scoped memory for tpu_custom_call.1']
    #allocation6 [shape = 'u8[8192]{0}', space=vmem, size = 0x2000, scoped, tag = 'input window, operand 1, single buffered']
    #allocation7 [shape = 'u8[8192]{0}', space=vmem, size = 0x2000, scoped, tag = 'output window, operand 0, single buffered']
    %7 = vsyncpa [#allocation5], 0
    %8 = vsyncpa [#allocation3], 0
    %9 = vsyncpa [#allocation4], 0
    // Predicated region
    $region2: #{tpu_custom_call.1} parent=1 // pred_check
      _
    $region3: #{tpu_custom_call.1} parent=1 // pred_check_branch
      %11 = sbr.rel (0) target = $region5
    $region4: #{tpu_custom_call.1} parent=1 // pred_region
      %s13 = ssub.s32 16, 16
      %14 = vsyncadd [#allocation5], %s13
      %17 = dma.hbm_to_smem %s0, 16, [#allocation2], [#allocation5]
    $region5: #{tpu_custom_call.1} parent=1 // pred_fallthru
      _
    // Predicated region
    $region6: #{tpu_custom_call.1} parent=1 // pred_check
      _
    $region7: #{tpu_custom_call.1} parent=1 // pred_check_branch
      %19 = sbr.rel (0) target = $region9
    $region8: #{tpu_custom_call.1} parent=1 // pred_region
      %s21 = ssub.s32 256, 256
      %22 = vsyncadd [#allocation3], %s21
      %s23 = sshll.u32 [#allocation6], 4
      %s24 = int_to_ptr.vmem [resolvable:$true] %s23
      %29 = dma.hbm_to_vmem [thread:$0]  %s1, 256, %s24, [#allocation3], 128, 128, 8
    $region9: #{tpu_custom_call.1} parent=1 // pred_fallthru
      _
    // Predicated region
    $region10: #{tpu_custom_call.1} parent=1 // pred_check
      _
    $region11: #{tpu_custom_call.1} parent=1 // pred_check_branch
      %31 = sbr.rel (0) target = $region13
    $region12: #{tpu_custom_call.1} parent=1 // pred_region
      %32 = dma.done [#allocation5], 16
    $region13: #{tpu_custom_call.1} parent=1 // pred_fallthru
      _
    // Predicated region
    $region14: #{tpu_custom_call.1} parent=1 // pred_check
      _
    $region15: #{tpu_custom_call.1} parent=1 // pred_check_branch
      %34 = sbr.rel (0) target = $region17
    $region16: #{tpu_custom_call.1} parent=1 // pred_region
      %35 = dma.done [#allocation3], 256
    $region17: #{tpu_custom_call.1} parent=1 // pred_fallthru
      _
    %36 = sfence
    %s37 = sld [smem:[#allocation2]]
    %s38 = sld [smem:[#allocation2 + $0x1]]
    %v39 = vld [vmem:[#allocation6] sm:$0xff]
    %v40 = vld [vmem:[#allocation6 + $0x8] sm:$0xff]
    %v41 = vstv %s37
    %v42 = vmul.f32 %v41, %v39
    %v43 = vmul.f32 %v41, %v40
    %v44 = vstv %s38
    %v45 = vadd.f32 %v42, %v44
    %v46 = vadd.f32 %v43, %v44
    %v47 = vand.u32 2147483647, %v45
    %v48 = vand.u32 2147483647, %v46
    %vm49 = vcmp.gt.f32.partialorder %v47, 2.4142137
    %vm50 = vcmp.gt.f32.partialorder %v48, 2.4142137
    %vm51 = vcmp.gt.f32.partialorder %v47, 0.41421357
    %vm52 = vcmp.gt.f32.partialorder %v48, 0.41421357
    %v53 = vsub.f32 %v47, 1.0
    %v54 = vsub.f32 %v48, 1.0
    %v55 = vsel %vm51, %v53, %v47
    %v56 = vsel %vm52, %v54, %v48
    %v57 = vsel %vm49, -1.0, %v55
    %v58 = vsel %vm50, -1.0, %v56
    %v59 = vadd.f32 %v47, 1.0
    %v60 = vadd.f32 %v48, 1.0
    %v61 = vsel %vm51, %v59, 1.0
    %v62 = vsel %vm52, %v60, 1.0
    %v63 = vsel %vm49, %v47, %v61
    %v64 = vsel %vm50, %v48, %v62
    %v65 = vrcp.pop %v63
    %v66 = vmul.f32 %v57, %v65
    %v67 = vrcp.pop %v64
    %v68 = vmul.f32 %v58, %v67
    %v69 = vsel %vm51, 0.7853982, 0.0
    %v70 = vsel %vm52, 0.7853982, 0.0
    %v71 = vsel %vm49, 1.5707964, %v69
    %v72 = vsel %vm50, 1.5707964, %v70
    %v73 = vmul.f32 %v66, %v66
    %v74 = vmul.f32 %v68, %v68
    %v75 = vmul.f32 %v73, 0.080537446
    %v76 = vmul.f32 %v74, 0.080537446
    %v77 = vadd.f32 %v75, -0.13877685
    %v78 = vadd.f32 %v76, -0.13877685
    %v79 = vmul.f32 %v77, %v73
    %v80 = vmul.f32 %v78, %v74
    %v81 = vadd.f32 %v79, 0.19977711
    %v82 = vadd.f32 %v80, 0.19977711
    %v83 = vmul.f32 %v81, %v73
    %v84 = vmul.f32 %v82, %v74
    %v85 = vadd.f32 %v83, -0.3333295
    %v86 = vadd.f32 %v84, -0.3333295
    %v87 = vmul.f32 %v85, %v73
    %v88 = vmul.f32 %v86, %v74
    %v89 = vmul.f32 %v87, %v66
    %v90 = vmul.f32 %v88, %v68
    %v91 = vadd.f32 %v89, %v66
    %v92 = vadd.f32 %v90, %v68
    %v93 = vadd.f32 %v71, %v91
    %v94 = vadd.f32 %v72, %v92
    %vm95 = vcmp.lt.f32.partialorder %v45, 0.0
    %vm96 = vcmp.lt.f32.partialorder %v46, 0.0
    %v97 = vsub.f32 0.0, %v93
    %v98 = vsub.f32 0.0, %v94
    %v99 = vsel %vm95, %v97, %v93
    %v100 = vsel %vm96, %v98, %v94
    %101 = vst [vmem:[#allocation7] sm:$0xff] %v99
    %102 = vst [vmem:[#allocation7 + $0x8] sm:$0xff] %v100
    // Predicated region
    $region18: #{tpu_custom_call.1} parent=1 // pred_check
      _
    $region19: #{tpu_custom_call.1} parent=1 // pred_check_branch
      %104 = sbr.rel (0) target = $region21
    $region20: #{tpu_custom_call.1} parent=1 // pred_region
      %s106 = ssub.s32 256, 256
      %107 = vsyncadd [#allocation4], %s106
      %s108 = sshll.u32 [#allocation7], 4
      %s109 = int_to_ptr.vmem [resolvable:$true] %s108
      %114 = dma.vmem_to_hbm [thread:$0]  %s109, 256, %s2, [#allocation4], 128, 128, 8
    $region21: #{tpu_custom_call.1} parent=1 // pred_fallthru
      _
    // Predicated region
    $region22: #{tpu_custom_call.1} parent=1 // pred_check
      _
    $region23: #{tpu_custom_call.1} parent=1 // pred_check_branch
      %116 = sbr.rel (0) target = $region25
    $region24: #{tpu_custom_call.1} parent=1 // pred_region
      %117 = dma.done [#allocation4], 256
    $region25: #{tpu_custom_call.1} parent=1 // pred_fallthru
      _
    %118 = vsyncpa [#allocation3], 1
    %119 = vsyncpa [#allocation4], 1
    %120 = vsyncpa [#allocation5], 1

</llo_original>
